<compile_context>
chip_gen: v6e
topology: v6e:2x2x1
jax: 0.10.0
libtpu: 0.0.40
codegen_flags: <defaults>
</compile_context>

<pallas_src>
import functools

import jax
import jax.numpy as jnp
from jax.experimental import pallas as pl
from jax.experimental.pallas import tpu as pltpu


# Flip to True to feed bf16 operands to the MXU (f32 accumulation preserved
# via preferred_element_type).  Loosens parity with the f32 reference.
USE_BF16_MATMUL = False


def _mxu(x, use_bf16):
    return x.astype(jnp.bfloat16) if use_bf16 else x


# ----------------------------------------------------------------------------
# Per-generation hardware sizing
# ----------------------------------------------------------------------------
def _vmem_capacity_bytes():
    try:
        return int(pltpu.get_tpu_info().vmem_capacity_bytes)
    except Exception:
        return 64 * 1024 * 1024  # conservative (v7x-sized) fallback


def _num_tensorcores():
    # v7x has 2 TensorCores per chip; v5e/v6e have 1.  A wrong guess only
    # affects a tile-size heuristic, never correctness.
    try:
        kind = jax.devices()[0].device_kind.lower()
    except Exception:
        return 2
    if any(t in kind for t in ("v5e", "v6e", "lite")):
        return 1
    return 2


_VMEM_CAP = _vmem_capacity_bytes()
# Scoped limit: half of physical, clamped to [32, 96] MiB
# (v5e/v6e: 64 MiB; v7x: 32 MiB).
_VMEM_LIMIT = max(32 * 1024 * 1024, min(96 * 1024 * 1024, _VMEM_CAP // 2))
_ATTN_BUDGET = _VMEM_CAP // 5          # ~25 MiB on 128 MiB chips, ~12 MiB on v7x
_LINEAR_BUDGET = _VMEM_CAP // 4
_ROW_TILE_CAP = 512 if _VMEM_CAP >= 100 * 1024 * 1024 else 256
_NUM_CORES = _num_tensorcores()


def _params(n_axes):
    return pltpu.CompilerParams(
        dimension_semantics=("parallel",) * n_axes,
        vmem_limit_bytes=_VMEM_LIMIT,
    )


def _row_tile(M, D, n_row_streams, weight_bytes, budget_bytes):
    """Largest multiple-of-8 row tile (ragged/masked last block allowed) that
    fits the VMEM budget given `n_row_streams` double-buffered (TM, D) f32
    blocks plus the (double-buffered) grid-invariant weights; capped per
    generation and split so a dual-TensorCore chip gets >= 2 grid steps."""
    if M <= 8:
        return M
    avail = budget_bytes - 2 * weight_bytes
    per_row = n_row_streams * 2 * D * 4            # double-buffered f32 rows
    tm = max(8, avail // per_row) if avail > 0 else 8
    tm = min(tm, _ROW_TILE_CAP, M)
    if _NUM_CORES >= 2 and M >= 16:
        tm = min(tm, M // 2)                       # >= 2 steps -> both TCs busy
    tm = max(8, (int(tm) // 8) * 8)
    return min(tm, M)


def _q_tile(S, cap=512):
    """Query tile for the attention grid: full S when small, else the largest
    multiple-of-8 divisor <= cap (bounds the (G, TQ, S) block for long S)."""
    if S <= cap:
        return S
    for tq in range(cap, 7, -8):
        if S % tq == 0:
            return tq
    return S  # pathological S: keep a single q block


def _heads_per_step(BH, S, TQ, d, budget_bytes):
    """Heads per attention grid step: as many as fit the VMEM budget, counting
    double-buffered DMA blocks (q, k, v, ctx, attn) AND the live softmax
    intermediates (s, e, p + slack).  On dual-TensorCore chips keep >= 2 grid
    steps; on single-core chips let one big step absorb everything."""
    per_head = 4 * (2 * (2 * TQ * d + 2 * S * d + TQ * S) + 4 * TQ * S)
    cap = max(1, budget_bytes // max(per_head, 1))
    if _NUM_CORES >= 2 and BH >= 2:
        cap = min(cap, max(1, BH // 2))
    cap = min(cap, BH)
    best = 1
    for g in range(1, cap + 1):
        if BH % g == 0:
            best = g
    return best


# ----------------------------------------------------------------------------
# Kernel 1: fused Q/K/V projections (one launch, three MXU matmuls), row-tiled.
# ----------------------------------------------------------------------------
def _qkv_kernel(xk_ref, xv_ref, xq_ref, wk_ref, wv_ref, wq_ref,
                bk_ref, bv_ref, bq_ref, k_ref, v_ref, q_ref, *, use_bf16):
    for x_ref, w_ref, b_ref, o_ref in (
        (xk_ref, wk_ref, bk_ref, k_ref),
        (xv_ref, wv_ref, bv_ref, v_ref),
        (xq_ref, wq_ref, bq_ref, q_ref),
    ):
        o_ref[...] = (
            jnp.dot(_mxu(x_ref[...], use_bf16), _mxu(w_ref[...], use_bf16),
                    preferred_element_type=jnp.float32)
            + b_ref[...]
        )


def qkv_projection(xk, xv, xq, wk, wv, wq, bk, bv, bq, *, use_bf16):
    # xk/xv/xq: (M, Din); w*: (Din, Dout); b*: (1, Dout) -> 3 x (M, Dout)
    M, Din = xq.shape
    Dout = wq.shape[1]
    weight_bytes = 3 * Din * Dout * 4
    TM = _row_tile(M, max(Din, Dout), 6, weight_bytes, _LINEAR_BUDGET)
    grid = (pl.cdiv(M, TM),)

    in_row = pl.BlockSpec((TM, Din), lambda i: (i, 0))
    out_row = pl.BlockSpec((TM, Dout), lambda i: (i, 0))
    w_spec = pl.BlockSpec((Din, Dout), lambda i: (0, 0))
    b_spec = pl.BlockSpec((1, Dout), lambda i: (0, 0))
    out_sds = jax.ShapeDtypeStruct((M, Dout), jnp.float32)

    kern = functools.partial(_qkv_kernel, use_bf16=use_bf16)
    return pl.pallas_call(
        kern,
        out_shape=(out_sds, out_sds, out_sds),
        grid=grid,
        in_specs=[in_row, in_row, in_row,
                  w_spec, w_spec, w_spec,
                  b_spec, b_spec, b_spec],
        out_specs=(out_row, out_row, out_row),
        compiler_params=_params(1),
    )(xk, xv, xq, wk, wv, wq, bk, bv, bq)


# ----------------------------------------------------------------------------
# Kernel 2: scaled dot-product attention — G heads x TQ query rows per step.
# ----------------------------------------------------------------------------
def _attn_kernel(q_ref, k_ref, v_ref, ctx_ref, attn_ref, *, scale, use_bf16):
    # Fold the softmax scale into q: G*TQ*d multiplies instead of G*TQ*S.
    q = q_ref[...] * scale                                        # (G, TQ, d)
    k = k_ref[...]                                                # (G, S,  d)
    v = v_ref[...]                                                # (G, S,  d)
    s = jnp.einsum("gqd,gkd->gqk", _mxu(q, use_bf16), _mxu(k, use_bf16),
                   preferred_element_type=jnp.float32)            # (G, TQ, S)
    m = jnp.max(s, axis=-1, keepdims=True)
    e = jnp.exp(s - m)
    # Exact softmax: the divide covers only G*TQ scalars per row reduction,
    # so approx reciprocal buys nothing and only degrades the returned probs.
    p = e / jnp.sum(e, axis=-1, keepdims=True)
    attn_ref[...] = p
    ctx_ref[...] = jnp.einsum("gqk,gkd->gqd", _mxu(p, use_bf16),
                              _mxu(v, use_bf16),
                              preferred_element_type=jnp.float32)  # (G, TQ, d)


def sdp_attention(q, k, v, scale, *, use_bf16):
    # q, k, v: (BH, S, d) -> context (BH, S, d), attention (BH, S, S)
    BH, S, d = q.shape
    TQ = _q_tile(S)
    G = _heads_per_step(BH, S, TQ, d, _ATTN_BUDGET)
    grid = (BH // G, pl.cdiv(S, TQ))

    kern = functools.partial(_attn_kernel, scale=scale, use_bf16=use_bf16)
    q_spec = pl.BlockSpec((G, TQ, d), lambda i, j: (i, j, 0))
    kv_spec = pl.BlockSpec((G, S, d), lambda i, j: (i, 0, 0))
    return pl.pallas_call(
        kern,
        out_shape=(
            jax.ShapeDtypeStruct((BH, S, d), jnp.float32),
            jax.ShapeDtypeStruct((BH, S, S), jnp.float32),
        ),
        grid=grid,
        in_specs=[q_spec, kv_spec, kv_spec],
        out_specs=(
            pl.BlockSpec((G, TQ, d), lambda i, j: (i, j, 0)),
            pl.BlockSpec((G, TQ, S), lambda i, j: (i, j, 0)),
        ),
        compiler_params=_params(2),
    )(q, k, v)


# ----------------------------------------------------------------------------
# Kernel 3: final linear + residual + LayerNorm (eps=1e-5), flattened to 2-D.
# ----------------------------------------------------------------------------
def _final_kernel(ctx_ref, res_ref, w_ref, b_ref, g_ref, beta_ref, o_ref, *,
                  use_bf16):
    x = (
        jnp.dot(_mxu(ctx_ref[...], use_bf16), _mxu(w_ref[...], use_bf16),
                preferred_element_type=jnp.float32)
        + b_ref[...]
    )
    y = res_ref[...] + x
    mean = jnp.mean(y, axis=-1, keepdims=True)
    var = jnp.mean((y - mean) ** 2, axis=-1, keepdims=True)
    yn = (y - mean) * jax.lax.rsqrt(var + 1e-5)
    o_ref[...] = yn * g_ref[...] + beta_ref[...]


def final_block(ctx2d, res2d, w, b, gamma, beta, *, use_bf16):
    # ctx2d, res2d: (M, D); w: (D, D); b/gamma/beta: (1, D) -> (M, D)
    M, D = ctx2d.shape
    TM = _row_tile(M, D, 3, D * D * 4, _LINEAR_BUDGET)
    grid = (pl.cdiv(M, TM),)

    row_spec = pl.BlockSpec((TM, D), lambda i: (i, 0))
    vec_spec = pl.BlockSpec((1, D), lambda i: (0, 0))
    kern = functools.partial(_final_kernel, use_bf16=use_bf16)
    return pl.pallas_call(
        kern,
        out_shape=jax.ShapeDtypeStruct((M, D), jnp.float32),
        grid=grid,
        in_specs=[
            row_spec,                                   # context
            row_spec,                                   # residual
            pl.BlockSpec((D, D), lambda i: (0, 0)),     # wf
            vec_spec, vec_spec, vec_spec,               # bias, gamma, beta
        ],
        out_specs=row_spec,
        compiler_params=_params(1),
    )(ctx2d, res2d, w, b, gamma, beta)


# ----------------------------------------------------------------------------
# Full module forward
# ----------------------------------------------------------------------------
def multi_head_attention(key, value, query, params, num_heads,
                         *, use_bf16=USE_BF16_MATMUL):
    B, S, D = query.shape
    if D % num_heads != 0:
        raise ValueError("model_dim must be divisible by num_heads")
    d = D // num_heads
    # HiTANet quirk: scale = (dim_per_head // num_heads) ** -0.5 (integer floor
    # division, exactly as in the torch module). Guard the degenerate case
    # instead of crashing with ZeroDivisionError.
    if d // num_heads == 0:
        raise ValueError(
            "HiTANet scale (dim_per_head // num_heads)**-0.5 is undefined for "
            f"dim_per_head={d} < num_heads={num_heads}")
    scale = float((d // num_heads) ** (-0.5))

    M = B * S
    residual2d = query.reshape(M, D)

    k2d, v2d, q2d = qkv_projection(
        key.reshape(M, D), value.reshape(M, D), query.reshape(M, D),
        params["wk"], params["wv"], params["wq"],
        params["bk"], params["bv"], params["bq"],
        use_bf16=use_bf16,
    )

    # HiTANet's raw contiguous view (NOT a head-split transpose).
    k = k2d.reshape(B * num_heads, S, d)
    v = v2d.reshape(B * num_heads, S, d)
    q = q2d.reshape(B * num_heads, S, d)

    context, attention = sdp_attention(q, k, v, scale, use_bf16=use_bf16)

    ctx2d = context.reshape(M, D)  # == context.view(B, -1, d*H) row-major
    out2d = final_block(
        ctx2d, residual2d, params["wf"], params["bf"],
        params["gamma"], params["beta"], use_bf16=use_bf16,
    )
    return out2d.reshape(B, S, D), attention


# ----------------------------------------------------------------------------
# Pure-JAX reference for verification
# ----------------------------------------------------------------------------
def reference(key, value, query, params, num_heads):
    B, S, D = query.shape
    d = D // num_heads
    residual = query
    k = key @ params["wk"] + params["bk"]
    v = value @ params["wv"] + params["bv"]
    q = query @ params["wq"] + params["bq"]
    k = k.reshape(B * num_heads, S, d)
    v = v.reshape(B * num_heads, S, d)
    q = q.reshape(B * num_heads, S, d)
    scale = (d // num_heads) ** (-0.5)
    att = jnp.einsum("bqd,bkd->bqk", q, k) * scale
    att = jax.nn.softmax(att, axis=2)
    ctx = jnp.einsum("bqk,bkd->bqd", att, v).reshape(B, S, D)
    out = ctx @ params["wf"] + params["bf"]
    y = residual + out
    mean = jnp.mean(y, axis=-1, keepdims=True)
    var = jnp.mean((y - mean) ** 2, axis=-1, keepdims=True)
    yn = (y - mean) / jnp.sqrt(var + 1e-5)
    return yn * params["gamma"] + params["beta"], att


# ----------------------------------------------------------------------------
if __name__ == "__main__":
    B, S, D, H = 2, 8, 32, 4  # batch, seq, model_dim, num_heads (d = 8)

    root = jax.random.PRNGKey(0)
    keys = jax.random.split(root, 8)

    # Deterministic synthetic parameters (weights stored as (Din, Dout),
    # i.e. already transposed relative to torch.nn.Linear.weight).
    params = {
        "wk": jax.random.normal(keys[0], (D, D), jnp.float32) * 0.1,
        "bk": jax.random.normal(keys[1], (1, D), jnp.float32) * 0.01,
        "wv": jax.random.normal(keys[2], (D, D), jnp.float32) * 0.1,
        "bv": jax.random.normal(keys[3], (1, D), jnp.float32) * 0.01,
        "wq": jax.random.normal(keys[4], (D, D), jnp.float32) * 0.1,
        "bq": jax.random.normal(keys[5], (1, D), jnp.float32) * 0.01,
        "wf": jax.random.normal(keys[6], (D, D), jnp.float32) * 0.1,
        "bf": jnp.zeros((1, D), jnp.float32),
        "gamma": jnp.ones((1, D), jnp.float32),
        "beta": jnp.zeros((1, D), jnp.float32),
    }

    ikeys = jax.random.split(jax.random.PRNGKey(42), 3)
    key_in = jax.random.normal(ikeys[0], (B, S, D), jnp.float32)
    value_in = jax.random.normal(ikeys[1], (B, S, D), jnp.float32)
    query_in = jax.random.normal(ikeys[2], (B, S, D), jnp.float32)

    out, attn = multi_head_attention(key_in, value_in, query_in, params, H)
    out = jax.block_until_ready(out)
    attn = jax.block_until_ready(attn)

    ref_out, ref_attn = reference(key_in, value_in, query_in, params, H)
    assert out.shape == (B, S, D) and attn.shape == (B * H, S, S)

    # Exact softmax + f32 MXU operands (USE_BF16_MATMUL=False) -> tight parity.
    tol = 2e-2 if USE_BF16_MATMUL else 1e-4
    assert jnp.allclose(attn, ref_attn, atol=tol, rtol=tol)
    assert jnp.allclose(out, ref_out, atol=tol, rtol=tol)

    print("KERNEL_OK")
</pallas_src>

<mosaic_0001>
module attributes {stable_mosaic.version = 11 : i64} {
  func.func @_qkv_kernel(%arg0: i32, %arg1: memref<8x32xf32, #tpu.memory_space<vmem>>, %arg2: memref<8x32xf32, #tpu.memory_space<vmem>>, %arg3: memref<8x32xf32, #tpu.memory_space<vmem>>, %arg4: memref<32x32xf32, #tpu.memory_space<vmem>>, %arg5: memref<32x32xf32, #tpu.memory_space<vmem>>, %arg6: memref<32x32xf32, #tpu.memory_space<vmem>>, %arg7: memref<1x32xf32, #tpu.memory_space<vmem>>, %arg8: memref<1x32xf32, #tpu.memory_space<vmem>>, %arg9: memref<1x32xf32, #tpu.memory_space<vmem>>, %arg10: memref<8x32xf32, #tpu.memory_space<vmem>>, %arg11: memref<8x32xf32, #tpu.memory_space<vmem>>, %arg12: memref<8x32xf32, #tpu.memory_space<vmem>>) attributes {dimension_semantics = [#tpu.dimension_semantics<parallel>], iteration_bounds = array<i64: 2>, scalar_prefetch = 0 : i64, scratch_operands = 0 : i64, tpu.core_type = #tpu.core_type<tc>, window_params = [{transform_indices = @transform_0, window_bounds = array<i64: 8, 32>}, {transform_indices = @transform_1, window_bounds = array<i64: 8, 32>}, {transform_indices = @transform_2, window_bounds = array<i64: 8, 32>}, {pipeline_mode = #tpu.pipeline_mode<synchronous>, transform_indices = @transform_3, window_bounds = array<i64: 32, 32>}, {pipeline_mode = #tpu.pipeline_mode<synchronous>, transform_indices = @transform_4, window_bounds = array<i64: 32, 32>}, {pipeline_mode = #tpu.pipeline_mode<synchronous>, transform_indices = @transform_5, window_bounds = array<i64: 32, 32>}, {pipeline_mode = #tpu.pipeline_mode<synchronous>, transform_indices = @transform_6, window_bounds = array<i64: 1, 32>}, {pipeline_mode = #tpu.pipeline_mode<synchronous>, transform_indices = @transform_7, window_bounds = array<i64: 1, 32>}, {pipeline_mode = #tpu.pipeline_mode<synchronous>, transform_indices = @transform_8, window_bounds = array<i64: 1, 32>}, {transform_indices = @transform_9, window_bounds = array<i64: 8, 32>}, {transform_indices = @transform_10, window_bounds = array<i64: 8, 32>}, {transform_indices = @transform_11, window_bounds = array<i64: 8, 32>}]} {
    %c0 = arith.constant 0 : index
    %c0_0 = arith.constant 0 : index
    %0 = vector.load %arg1[%c0, %c0_0] : memref<8x32xf32, #tpu.memory_space<vmem>>, vector<8x32xf32>
    %c0_1 = arith.constant 0 : index
    %c0_2 = arith.constant 0 : index
    %1 = vector.load %arg4[%c0_1, %c0_2] : memref<32x32xf32, #tpu.memory_space<vmem>>, vector<32x32xf32>
    %cst = arith.constant dense<0.000000e+00> : vector<8x32xf32>
    %2 = tpu.matmul %0, %1, %cst {dimension_numbers = #tpu.dot_dimension_numbers<[1], [0], [0], [1], [0, 0, 1, 1], [], []>} : vector<8x32xf32>, vector<32x32xf32>, vector<8x32xf32> -> vector<8x32xf32>
    %c0_3 = arith.constant 0 : index
    %c0_4 = arith.constant 0 : index
    %3 = vector.load %arg7[%c0_3, %c0_4] : memref<1x32xf32, #tpu.memory_space<vmem>>, vector<1x32xf32>
    %4 = vector.broadcast %3 : vector<1x32xf32> to vector<8x32xf32>
    %5 = arith.addf %2, %4 : vector<8x32xf32>
    %c0_5 = arith.constant 0 : index
    %c0_6 = arith.constant 0 : index
    %6 = vector.load %arg10[%c0_5, %c0_6] : memref<8x32xf32, #tpu.memory_space<vmem>>, vector<8x32xf32>
    tpu.vector_store %arg10[%c0_5, %c0_6], %5 {strides = array<i32>} : memref<8x32xf32, #tpu.memory_space<vmem>>, vector<8x32xf32>,
    %c0_7 = arith.constant 0 : index
    %c0_8 = arith.constant 0 : index
    %7 = vector.load %arg2[%c0_7, %c0_8] : memref<8x32xf32, #tpu.memory_space<vmem>>, vector<8x32xf32>
    %c0_9 = arith.constant 0 : index
    %c0_10 = arith.constant 0 : index
    %8 = vector.load %arg5[%c0_9, %c0_10] : memref<32x32xf32, #tpu.memory_space<vmem>>, vector<32x32xf32>
    %cst_11 = arith.constant dense<0.000000e+00> : vector<8x32xf32>
    %9 = tpu.matmul %7, %8, %cst_11 {dimension_numbers = #tpu.dot_dimension_numbers<[1], [0], [0], [1], [0, 0, 1, 1], [], []>} : vector<8x32xf32>, vector<32x32xf32>, vector<8x32xf32> -> vector<8x32xf32>
    %c0_12 = arith.constant 0 : index
    %c0_13 = arith.constant 0 : index
    %10 = vector.load %arg8[%c0_12, %c0_13] : memref<1x32xf32, #tpu.memory_space<vmem>>, vector<1x32xf32>
    %11 = vector.broadcast %10 : vector<1x32xf32> to vector<8x32xf32>
    %12 = arith.addf %9, %11 : vector<8x32xf32>
    %c0_14 = arith.constant 0 : index
    %c0_15 = arith.constant 0 : index
    %13 = vector.load %arg11[%c0_14, %c0_15] : memref<8x32xf32, #tpu.memory_space<vmem>>, vector<8x32xf32>
    tpu.vector_store %arg11[%c0_14, %c0_15], %12 {strides = array<i32>} : memref<8x32xf32, #tpu.memory_space<vmem>>, vector<8x32xf32>,
    %c0_16 = arith.constant 0 : index
    %c0_17 = arith.constant 0 : index
    %14 = vector.load %arg3[%c0_16, %c0_17] : memref<8x32xf32, #tpu.memory_space<vmem>>, vector<8x32xf32>
    %c0_18 = arith.constant 0 : index
    %c0_19 = arith.constant 0 : index
    %15 = vector.load %arg6[%c0_18, %c0_19] : memref<32x32xf32, #tpu.memory_space<vmem>>, vector<32x32xf32>
    %cst_20 = arith.constant dense<0.000000e+00> : vector<8x32xf32>
    %16 = tpu.matmul %14, %15, %cst_20 {dimension_numbers = #tpu.dot_dimension_numbers<[1], [0], [0], [1], [0, 0, 1, 1], [], []>} : vector<8x32xf32>, vector<32x32xf32>, vector<8x32xf32> -> vector<8x32xf32>
    %c0_21 = arith.constant 0 : index
    %c0_22 = arith.constant 0 : index
    %17 = vector.load %arg9[%c0_21, %c0_22] : memref<1x32xf32, #tpu.memory_space<vmem>>, vector<1x32xf32>
    %18 = vector.broadcast %17 : vector<1x32xf32> to vector<8x32xf32>
    %19 = arith.addf %16, %18 : vector<8x32xf32>
    %c0_23 = arith.constant 0 : index
    %c0_24 = arith.constant 0 : index
    %20 = vector.load %arg12[%c0_23, %c0_24] : memref<8x32xf32, #tpu.memory_space<vmem>>, vector<8x32xf32>
    tpu.vector_store %arg12[%c0_23, %c0_24], %19 {strides = array<i32>} : memref<8x32xf32, #tpu.memory_space<vmem>>, vector<8x32xf32>,
    return
  }
  func.func @transform_0(%arg0: i32) -> (i32, i32) {
    %c0_i32 = arith.constant 0 : i32
    %c0_i32_0 = arith.constant 0 : i32
    return %arg0, %c0_i32 : i32, i32
  }
  func.func @transform_1(%arg0: i32) -> (i32, i32) {
    %c0_i32 = arith.constant 0 : i32
    %c0_i32_0 = arith.constant 0 : i32
    return %arg0, %c0_i32 : i32, i32
  }
  func.func @transform_2(%arg0: i32) -> (i32, i32) {
    %c0_i32 = arith.constant 0 : i32
    %c0_i32_0 = arith.constant 0 : i32
    return %arg0, %c0_i32 : i32, i32
  }
  func.func @transform_3(%arg0: i32) -> (i32, i32) {
    %c0_i32 = arith.constant 0 : i32
    %c0_i32_0 = arith.constant 0 : i32
    %c0_i32_1 = arith.constant 0 : i32
    return %c0_i32, %c0_i32_0 : i32, i32
  }
  func.func @transform_4(%arg0: i32) -> (i32, i32) {
    %c0_i32 = arith.constant 0 : i32
    %c0_i32_0 = arith.constant 0 : i32
    %c0_i32_1 = arith.constant 0 : i32
    return %c0_i32, %c0_i32_0 : i32, i32
  }
  func.func @transform_5(%arg0: i32) -> (i32, i32) {
    %c0_i32 = arith.constant 0 : i32
    %c0_i32_0 = arith.constant 0 : i32
    %c0_i32_1 = arith.constant 0 : i32
    return %c0_i32, %c0_i32_0 : i32, i32
  }
  func.func @transform_6(%arg0: i32) -> (i32, i32) {
    %c0_i32 = arith.constant 0 : i32
    %c0_i32_0 = arith.constant 0 : i32
    %c0_i32_1 = arith.constant 0 : i32
    return %c0_i32, %c0_i32_0 : i32, i32
  }
  func.func @transform_7(%arg0: i32) -> (i32, i32) {
    %c0_i32 = arith.constant 0 : i32
    %c0_i32_0 = arith.constant 0 : i32
    %c0_i32_1 = arith.constant 0 : i32
    return %c0_i32, %c0_i32_0 : i32, i32
  }
  func.func @transform_8(%arg0: i32) -> (i32, i32) {
    %c0_i32 = arith.constant 0 : i32
    %c0_i32_0 = arith.constant 0 : i32
    %c0_i32_1 = arith.constant 0 : i32
    return %c0_i32, %c0_i32_0 : i32, i32
  }
  func.func @transform_9(%arg0: i32) -> (i32, i32) {
    %c0_i32 = arith.constant 0 : i32
    %c0_i32_0 = arith.constant 0 : i32
    return %arg0, %c0_i32 : i32, i32
  }
  func.func @transform_10(%arg0: i32) -> (i32, i32) {
    %c0_i32 = arith.constant 0 : i32
    %c0_i32_0 = arith.constant 0 : i32
    return %arg0, %c0_i32 : i32, i32
  }
  func.func @transform_11(%arg0: i32) -> (i32, i32) {
    %c0_i32 = arith.constant 0 : i32
    %c0_i32_0 = arith.constant 0 : i32
    return %arg0, %c0_i32 : i32, i32
  }
}

</mosaic_0001>

<llo_original>
// kernel: tpu_custom_call.1
$region0: #{tpu_custom_call.1}
  #allocation0 [shape = 'u32[]', space=smem, size = 0x4, offset = 0x4, fixed_abs, tag = 'smem constant byte address 0x4 - core index']
  #allocation1 [shape = 'u32[144,128]{1,0:T(1,128)}', space=vmem, size = 0x12000, scoped, tag = 'internal scratch']
  %s0 = inlined_call_operand.hbm [shape: f32[16,32], index: 0, kind: input, shape index: {}]
  %s1 = inlined_call_operand.hbm [shape: f32[16,32], index: 1, kind: input, shape index: {}]
  %s2 = inlined_call_operand.hbm [shape: f32[16,32], index: 2, kind: input, shape index: {}]
  %s3 = inlined_call_operand.hbm [shape: f32[32,32], index: 3, kind: input, shape index: {}]
  %s4 = inlined_call_operand.hbm [shape: f32[32,32], index: 4, kind: input, shape index: {}]
  %s5 = inlined_call_operand.hbm [shape: f32[32,32], index: 5, kind: input, shape index: {}]
  %s6 = inlined_call_operand.vmem [shape: f32[1,32], index: 6, kind: input, shape index: {}]
  %s7 = inlined_call_operand.vmem [shape: f32[1,32], index: 7, kind: input, shape index: {}]
  %s8 = inlined_call_operand.vmem [shape: f32[1,32], index: 8, kind: input, shape index: {}]
  %s9 = inlined_call_operand.hbm [shape: f32[16,32], index: 9, kind: output, shape index: {0}]
  %s10 = inlined_call_operand.hbm [shape: f32[16,32], index: 10, kind: output, shape index: {1}]
  %s11 = inlined_call_operand.hbm [shape: f32[16,32], index: 11, kind: output, shape index: {2}]
  %12 = xla_tuple %s9, %s10, %s11
  %s13 = sld [smem:[#allocation0]]
  $region109: #{tpu_custom_call.1} parent=0
    _
  %s15 = ssub.s32 1, %s13
  %s16 = scalar_select 0, %s15, %s13
  $region1: #{tpu_custom_call.1} parent=0
    #allocation2 [shape = 'u8[8192]{0}', space=vmem, size = 0x2000, scoped, tag = 'input window, operand 0']
    #allocation3 [shape = 's32[2]{0}', space=sflag, size = 0x8, scoped, tag = 'scoped memory for tpu_custom_call.1']
    #allocation4 [shape = 's32[2]{0}', space=sflag, size = 0x8, scoped, tag = 'scoped memory for tpu_custom_call.1']
    #allocation5 [shape = 'u8[8192]{0}', space=vmem, size = 0x2000, scoped, tag = 'input window, operand 1']
    #allocation6 [shape = 's32[2]{0}', space=sflag, size = 0x8, scoped, tag = 'scoped memory for tpu_custom_call.1']
    #allocation7 [shape = 'u8[8192]{0}', space=vmem, size = 0x2000, scoped, tag = 'input window, operand 2']
    #allocation8 [shape = 'u8[16384]{0}', space=vmem, size = 0x4000, scoped, tag = 'input window, operand 3, single buffered']
    #allocation9 [shape = 's32[1]{0}', space=sflag, size = 0x4, scoped, tag = 'scoped memory for tpu_custom_call.1']
    #allocation10 [shape = 'u8[16384]{0}', space=vmem, size = 0x4000, scoped, tag = 'input window, operand 4, single buffered']
    #allocation11 [shape = 'u8[16384]{0}', space=vmem, size = 0x4000, scoped, tag = 'input window, operand 5, single buffered']
    #allocation12 [shape = 's32[1]{0}', space=sflag, size = 0x4, scoped, tag = 'scoped memory for tpu_custom_call.1']
    #allocation13 [shape = 'u8[8192]{0}', space=vmem, size = 0x2000, scoped, tag = 'output window, operand 0']
    #allocation14 [shape = 'u8[8192]{0}', space=vmem, size = 0x2000, scoped, tag = 'output window, operand 1']
    #allocation15 [shape = 's32[2]{0}', space=sflag, size = 0x8, scoped, tag = 'scoped memory for tpu_custom_call.1']
    #allocation16 [shape = 'u8[8192]{0}', space=vmem, size = 0x2000, scoped, tag = 'output window, operand 2']
    %17 = vsyncpa [#allocation3], 0
    %s18 = scalar_lea.sflag [#allocation3], 1
    %19 = vsyncpa %s18, 0
    %20 = vsyncpa [#allocation6], 0
    %s21 = scalar_lea.sflag [#allocation6], 1
    %22 = vsyncpa %s21, 0
    %23 = vsyncpa [#allocation9], 0
    %24 = vsyncpa [#allocation12], 0
    %25 = vsyncpa [#allocation4], 0
    %s26 = scalar_lea.sflag [#allocation4], 1
    %27 = vsyncpa %s26, 0
    %28 = vsyncpa [#allocation15], 0
    %s29 = scalar_lea.sflag [#allocation15], 1
    %30 = vsyncpa %s29, 0
    loop: start=0, step=1, limit=4
    $region2: #{tpu_custom_call.1} parent=1 // loop_pre_header
      _
    $region3: #{tpu_custom_call.1} parent=1 // loop_header
      %s32 = sphi 0, %s36
      %p33 = scmp.ge.s32.totalorder %s32, 4
      %s42 = sphi 0, %s44
      %s45 = sphi 0, %s42
      %s46 = sphi 0, %s45
      %s62 = sphi 0, %s46
      %s68 = sphi 0, %s70
      %s71 = sphi 0, %s68
      %s72 = sphi 0, %s71
      %s88 = sphi 0, %s72
      %s94 = sphi 0, %s96
      %s97 = sphi 0, %s94
      %s98 = sphi 0, %s97
      %s114 = sphi 0, %s98
      %s118 = sphi 0, %s118
      %s120 = sphi 0, %s118
      %s121 = sphi 0, %s120
      %s135 = sphi 0, %s121
      %s139 = sphi 0, %s139
      %s141 = sphi 0, %s139
      %s142 = sphi 0, %s141
      %s156 = sphi 0, %s142
      %s160 = sphi 0, %s160
      %s162 = sphi 0, %s160
      %s163 = sphi 0, %s162
      %s177 = sphi 0, %s163
      %s181 = sphi 0, %s181
      %s183 = sphi 0, %s181
      %s184 = sphi 0, %s183
      %s198 = sphi 0, %s184
      %s202 = sphi 0, %s202
      %s204 = sphi 0, %s202
      %s205 = sphi 0, %s204
      %s219 = sphi 0, %s205
      %s223 = sphi 0, %s223
      %s225 = sphi 0, %s223
      %s226 = sphi 0, %s225
      %s240 = sphi 0, %s226
      %s246 = sphi 0, %s248
      %s249 = sphi 0, %s246
      %s250 = sphi 0, %s249
      %s266 = sphi 0, %s250
      %s272 = sphi 0, %s274
      %s275 = sphi 0, %s272
      %s276 = sphi 0, %s275
      %s292 = sphi 0, %s276
      %s298 = sphi 0, %s300
      %s301 = sphi 0, %s298
      %s302 = sphi 0, %s301
      %s318 = sphi 0, %s302
    $region4: #{tpu_custom_call.1} parent=1 // loop_header_branch
      %35 = sbr.rel (%p33) target = $region8
    $region5: #{tpu_custom_call.1} parent=1 // loop_body
      %s37 = ssub.s32 %s32, 1
      %s38 = ssub.s32 %s32, 2
      %s39 = sadd.s32 %s32, 1
      %s40 = ssub.s32 %s32, %s39
      %p41 = scmp.eq.s32.totalorder %s40, 0
      %s43 = sadd.s32 %s42, 1
      %s44 = scalar_select %p41, %s42, %s43
      %p47 = pneg %p41
      %p48 = scmp.eq.s32.totalorder %s32, 1
      %p49 = por %p47, %p48
      %p50 = scmp.ne.s32.totalorder %s42, %s45
      %p51 = scmp.eq.s32.totalorder %s32, 0
      %p52 = por %p50, %p51
      %p53 = scmp.ne.s32.totalorder %s42, %s45
      %p54 = scmp.eq.s32.totalorder %s37, 1
      %p55 = por %p53, %p54
      %p56 = scmp.ne.s32.totalorder %s45, %s46
      %p57 = scmp.eq.s32.totalorder %s37, 0
      %p58 = por %p56, %p57
      %p59 = scmp.ne.s32.totalorder %s45, %s46
      %p60 = scmp.eq.s32.totalorder %s38, 1
      %p61 = por %p59, %p60
      %p63 = scmp.ne.s32.totalorder %s46, %s62
      %p64 = scmp.eq.s32.totalorder %s38, 0
      %p65 = por %p63, %p64
      %s66 = ssub.s32 %s32, %s39
      %p67 = scmp.eq.s32.totalorder %s66, 0
      %s69 = sadd.s32 %s68, 1
      %s70 = scalar_select %p67, %s68, %s69
      %p73 = pneg %p67
      %p74 = scmp.eq.s32.totalorder %s32, 1
      %p75 = por %p73, %p74
      %p76 = scmp.ne.s32.totalorder %s68, %s71
      %p77 = scmp.eq.s32.totalorder %s32, 0
      %p78 = por %p76, %p77
      %p79 = scmp.ne.s32.totalorder %s68, %s71
      %p80 = scmp.eq.s32.totalorder %s37, 1
      %p81 = por %p79, %p80
      %p82 = scmp.ne.s32.totalorder %s71, %s72
      %p83 = scmp.eq.s32.totalorder %s37, 0
      %p84 = por %p82, %p83
      %p85 = scmp.ne.s32.totalorder %s71, %s72
      %p86 = scmp.eq.s32.totalorder %s38, 1
      %p87 = por %p85, %p86
      %p89 = scmp.ne.s32.totalorder %s72, %s88
      %p90 = scmp.eq.s32.totalorder %s38, 0
      %p91 = por %p89, %p90
      %s92 = ssub.s32 %s32, %s39
      %p93 = scmp.eq.s32.totalorder %s92, 0
      %s95 = sadd.s32 %s94, 1
      %s96 = scalar_select %p93, %s94, %s95
      %p99 = pneg %p93
      %p100 = scmp.eq.s32.totalorder %s32, 1
      %p101 = por %p99, %p100
      %p102 = scmp.ne.s32.totalorder %s94, %s97
      %p103 = scmp.eq.s32.totalorder %s32, 0
      %p104 = por %p102, %p103
      %p105 = scmp.ne.s32.totalorder %s94, %s97
      %p106 = scmp.eq.s32.totalorder %s37, 1
      %p107 = por %p105, %p106
      %p108 = scmp.ne.s32.totalorder %s97, %s98
      %p109 = scmp.eq.s32.totalorder %s37, 0
      %p110 = por %p108, %p109
      %p111 = scmp.ne.s32.totalorder %s97, %s98
      %p112 = scmp.eq.s32.totalorder %s38, 1
      %p113 = por %p111, %p112
      %p115 = scmp.ne.s32.totalorder %s98, %s114
      %p116 = scmp.eq.s32.totalorder %s38, 0
      %p117 = por %p115, %p116
      %s119 = sadd.s32 %s118, 1
      %p122 = scmp.eq.s32.totalorder %s32, 1
      %p123 = scmp.ne.s32.totalorder %s118, %s120
      %p124 = scmp.eq.s32.totalorder %s32, 0
      %p125 = por %p123, %p124
      %p126 = scmp.ne.s32.totalorder %s118, %s120
      %p127 = scmp.eq.s32.totalorder %s37, 1
      %p128 = por %p126, %p127
      %p129 = scmp.ne.s32.totalorder %s120, %s121
      %p130 = scmp.eq.s32.totalorder %s37, 0
      %p131 = por %p129, %p130
      %p132 = scmp.ne.s32.totalorder %s120, %s121
      %p133 = scmp.eq.s32.totalorder %s38, 1
      %p134 = por %p132, %p133
      %p136 = scmp.ne.s32.totalorder %s121, %s135
      %p137 = scmp.eq.s32.totalorder %s38, 0
      %p138 = por %p136, %p137
      %s140 = sadd.s32 %s139, 1
      %p143 = scmp.eq.s32.totalorder %s32, 1
      %p144 = scmp.ne.s32.totalorder %s139, %s141
      %p145 = scmp.eq.s32.totalorder %s32, 0
      %p146 = por %p144, %p145
      %p147 = scmp.ne.s32.totalorder %s139, %s141
      %p148 = scmp.eq.s32.totalorder %s37, 1
      %p149 = por %p147, %p148
      %p150 = scmp.ne.s32.totalorder %s141, %s142
      %p151 = scmp.eq.s32.totalorder %s37, 0
      %p152 = por %p150, %p151
      %p153 = scmp.ne.s32.totalorder %s141, %s142
      %p154 = scmp.eq.s32.totalorder %s38, 1
      %p155 = por %p153, %p154
      %p157 = scmp.ne.s32.totalorder %s142, %s156
      %p158 = scmp.eq.s32.totalorder %s38, 0
      %p159 = por %p157, %p158
      %s161 = sadd.s32 %s160, 1
      %p164 = scmp.eq.s32.totalorder %s32, 1
      %p165 = scmp.ne.s32.totalorder %s160, %s162
      %p166 = scmp.eq.s32.totalorder %s32, 0
      %p167 = por %p165, %p166
      %p168 = scmp.ne.s32.totalorder %s160, %s162
      %p169 = scmp.eq.s32.totalorder %s37, 1
      %p170 = por %p168, %p169
      %p171 = scmp.ne.s32.totalorder %s162, %s163
      %p172 = scmp.eq.s32.totalorder %s37, 0
      %p173 = por %p171, %p172
      %p174 = scmp.ne.s32.totalorder %s162, %s163
      %p175 = scmp.eq.s32.totalorder %s38, 1
      %p176 = por %p174, %p175
      %p178 = scmp.ne.s32.totalorder %s163, %s177
      %p179 = scmp.eq.s32.totalorder %s38, 0
      %p180 = por %p178, %p179
      %s182 = sadd.s32 %s181, 1
      %p185 = scmp.eq.s32.totalorder %s32, 1
      %p186 = scmp.ne.s32.totalorder %s181, %s183
      %p187 = scmp.eq.s32.totalorder %s32, 0
      %p188 = por %p186, %p187
      %p189 = scmp.ne.s32.totalorder %s181, %s183
      %p190 = scmp.eq.s32.totalorder %s37, 1
      %p191 = por %p189, %p190
      %p192 = scmp.ne.s32.totalorder %s183, %s184
      %p193 = scmp.eq.s32.totalorder %s37, 0
      %p194 = por %p192, %p193
      %p195 = scmp.ne.s32.totalorder %s183, %s184
      %p196 = scmp.eq.s32.totalorder %s38, 1
      %p197 = por %p195, %p196
      %p199 = scmp.ne.s32.totalorder %s184, %s198
      %p200 = scmp.eq.s32.totalorder %s38, 0
      %p201 = por %p199, %p200
      %s203 = sadd.s32 %s202, 1
      %p206 = scmp.eq.s32.totalorder %s32, 1
      %p207 = scmp.ne.s32.totalorder %s202, %s204
      %p208 = scmp.eq.s32.totalorder %s32, 0
      %p209 = por %p207, %p208
      %p210 = scmp.ne.s32.totalorder %s202, %s204
      %p211 = scmp.eq.s32.totalorder %s37, 1
      %p212 = por %p210, %p211
      %p213 = scmp.ne.s32.totalorder %s204, %s205
      %p214 = scmp.eq.s32.totalorder %s37, 0
      %p215 = por %p213, %p214
      %p216 = scmp.ne.s32.totalorder %s204, %s205
      %p217 = scmp.eq.s32.totalorder %s38, 1
      %p218 = por %p216, %p217
      %p220 = scmp.ne.s32.totalorder %s205, %s219
      %p221 = scmp.eq.s32.totalorder %s38, 0
      %p222 = por %p220, %p221
      %s224 = sadd.s32 %s223, 1
      %p227 = scmp.eq.s32.totalorder %s32, 1
      %p228 = scmp.ne.s32.totalorder %s223, %s225
      %p229 = scmp.eq.s32.totalorder %s32, 0
      %p230 = por %p228, %p229
      %p231 = scmp.ne.s32.totalorder %s223, %s225
      %p232 = scmp.eq.s32.totalorder %s37, 1
      %p233 = por %p231, %p232
      %p234 = scmp.ne.s32.totalorder %s225, %s226
      %p235 = scmp.eq.s32.totalorder %s37, 0
      %p236 = por %p234, %p235
      %p237 = scmp.ne.s32.totalorder %s225, %s226
      %p238 = scmp.eq.s32.totalorder %s38, 1
      %p239 = por %p237, %p238
      %p241 = scmp.ne.s32.totalorder %s226, %s240
      %p242 = scmp.eq.s32.totalorder %s38, 0
      %p243 = por %p241, %p242
      %s244 = ssub.s32 %s32, %s39
      %p245 = scmp.eq.s32.totalorder %s244, 0
      %s247 = sadd.s32 %s246, 1
      %s248 = scalar_select %p245, %s246, %s247
      %p251 = pneg %p245
      %p252 = scmp.eq.s32.totalorder %s32, 1
      %p253 = por %p251, %p252
      %p254 = scmp.ne.s32.totalorder %s246, %s249
      %p255 = scmp.eq.s32.totalorder %s32, 0
      %p256 = por %p254, %p255
      %p257 = scmp.ne.s32.totalorder %s246, %s249
      %p258 = scmp.eq.s32.totalorder %s37, 1
      %p259 = por %p257, %p258
      %p260 = scmp.ne.s32.totalorder %s249, %s250
      %p261 = scmp.eq.s32.totalorder %s37, 0
      %p262 = por %p260, %p261
      %p263 = scmp.ne.s32.totalorder %s249, %s250
      %p264 = scmp.eq.s32.totalorder %s38, 1
      %p265 = por %p263, %p264
      %p267 = scmp.ne.s32.totalorder %s250, %s266
      %p268 = scmp.eq.s32.totalorder %s38, 0
      %p269 = por %p267, %p268
      %s270 = ssub.s32 %s32, %s39
      %p271 = scmp.eq.s32.totalorder %s270, 0
      %s273 = sadd.s32 %s272, 1
      %s274 = scalar_select %p271, %s272, %s273
      %p277 = pneg %p271
      %p278 = scmp.eq.s32.totalorder %s32, 1
      %p279 = por %p277, %p278
      %p280 = scmp.ne.s32.totalorder %s272, %s275
      %p281 = scmp.eq.s32.totalorder %s32, 0
      %p282 = por %p280, %p281
      %p283 = scmp.ne.s32.totalorder %s272, %s275
      %p284 = scmp.eq.s32.totalorder %s37, 1
      %p285 = por %p283, %p284
      %p286 = scmp.ne.s32.totalorder %s275, %s276
      %p287 = scmp.eq.s32.totalorder %s37, 0
      %p288 = por %p286, %p287
      %p289 = scmp.ne.s32.totalorder %s275, %s276
      %p290 = scmp.eq.s32.totalorder %s38, 1
      %p291 = por %p289, %p290
      %p293 = scmp.ne.s32.totalorder %s276, %s292
      %p294 = scmp.eq.s32.totalorder %s38, 0
      %p295 = por %p293, %p294
      %s296 = ssub.s32 %s32, %s39
      %p297 = scmp.eq.s32.totalorder %s296, 0
      %s299 = sadd.s32 %s298, 1
      %s300 = scalar_select %p297, %s298, %s299
      %p303 = pneg %p297
      %p304 = scmp.eq.s32.totalorder %s32, 1
      %p305 = por %p303, %p304
      %p306 = scmp.ne.s32.totalorder %s298, %s301
      %p307 = scmp.eq.s32.totalorder %s32, 0
      %p308 = por %p306, %p307
      %p309 = scmp.ne.s32.totalorder %s298, %s301
      %p310 = scmp.eq.s32.totalorder %s37, 1
      %p311 = por %p309, %p310
      %p312 = scmp.ne.s32.totalorder %s301, %s302
      %p313 = scmp.eq.s32.totalorder %s37, 0
      %p314 = por %p312, %p313
      %p315 = scmp.ne.s32.totalorder %s301, %s302
      %p316 = scmp.eq.s32.totalorder %s38, 1
      %p317 = por %p315, %p316
      %p319 = scmp.ne.s32.totalorder %s302, %s318
      %p320 = scmp.eq.s32.totalorder %s38, 0
      %p321 = por %p319, %p320
      %p322 = scmp.le.s32.totalorder 1, %s32
      %p323 = scmp.lt.s32.totalorder %s32, 3
      %p324 = pnand %p322, %p323
      %p325 = pneg %p324
      // Predicated region
      $region9: #{tpu_custom_call.1} parent=5 // pred_check
        _
      $region10: #{tpu_custom_call.1} parent=5 // pred_check_branch
        %327 = sbr.rel (%p324) target = $region12
      $region11: #{tpu_custom_call.1} parent=5 // pred_region
        %s328 = ssub.s32 %s32, 1
        // Predicated region
        $region13: #{tpu_custom_call.1} parent=11 // pred_check
          %p329 = pneg %p131
        $region14: #{tpu_custom_call.1} parent=11 // pred_check_branch
          %331 = sbr.rel (%p329) target = $region16
        $region15: #{tpu_custom_call.1} parent=11 // pred_region
          %s333 = ssub.s32 512, 512
          %334 = vsyncadd [#allocation9], %s333
          %s335 = sshll.u32 [#allocation8], 4
          %s336 = int_to_ptr.vmem [resolvable:$true] %s335
          %341 = dma.hbm_to_vmem [thread:$0]  %s3, 512, %s336, [#allocation9], 128, 128, 8
        $region16: #{tpu_custom_call.1} parent=11 // pred_fallthru
          _
        // Predicated region
        $region17: #{tpu_custom_call.1} parent=11 // pred_check
          %p342 = pneg %p152
        $region18: #{tpu_custom_call.1} parent=11 // pred_check_branch
          %344 = sbr.rel (%p342) target = $region20
        $region19: #{tpu_custom_call.1} parent=11 // pred_region
          %s346 = ssub.s32 512, 512
          %347 = vsyncadd [#allocation9], %s346
          %s348 = sshll.u32 [#allocation10], 4
          %s349 = int_to_ptr.vmem [resolvable:$true] %s348
          %354 = dma.hbm_to_vmem [thread:$0]  %s4, 512, %s349, [#allocation9], 128, 128, 8
        $region20: #{tpu_custom_call.1} parent=11 // pred_fallthru
          _
        // Predicated region
        $region21: #{tpu_custom_call.1} parent=11 // pred_check
          %p355 = pneg %p173
        $region22: #{tpu_custom_call.1} parent=11 // pred_check_branch
          %357 = sbr.rel (%p355) target = $region24
        $region23: #{tpu_custom_call.1} parent=11 // pred_region
          %s359 = ssub.s32 512, 512
          %360 = vsyncadd [#allocation12], %s359
          %s361 = sshll.u32 [#allocation11], 4
          %s362 = int_to_ptr.vmem [resolvable:$true] %s361
          %367 = dma.hbm_to_vmem [thread:$0]  %s5, 512, %s362, [#allocation12], 128, 128, 8
        $region24: #{tpu_custom_call.1} parent=11 // pred_fallthru
          _
        // Predicated region
        $region25: #{tpu_custom_call.1} parent=11 // pred_check
          %p368 = pneg %p194
        $region26: #{tpu_custom_call.1} parent=11 // pred_check_branch
          %370 = sbr.rel (%p368) target = $region28
        $region27: #{tpu_custom_call.1} parent=11 // pred_region
          _
        $region28: #{tpu_custom_call.1} parent=11 // pred_fallthru
          _
        // Predicated region
        $region29: #{tpu_custom_call.1} parent=11 // pred_check
          %p371 = pneg %p215
        $region30: #{tpu_custom_call.1} parent=11 // pred_check_branch
          %373 = sbr.rel (%p371) target = $region32
        $region31: #{tpu_custom_call.1} parent=11 // pred_region
          _
        $region32: #{tpu_custom_call.1} parent=11 // pred_fallthru
          _
        // Predicated region
        $region33: #{tpu_custom_call.1} parent=11 // pred_check
          %p374 = pneg %p236
        $region34: #{tpu_custom_call.1} parent=11 // pred_check_branch
          %376 = sbr.rel (%p374) target = $region36
        $region35: #{tpu_custom_call.1} parent=11 // pred_region
          _
        $region36: #{tpu_custom_call.1} parent=11 // pred_fallthru
          _
      $region12: #{tpu_custom_call.1} parent=5 // pred_fallthru
        _
      %p377 = scmp.lt.s32.totalorder %s32, 2
      // Predicated region
      $region37: #{tpu_custom_call.1} parent=5 // pred_check
        %p378 = pneg %p377
      $region38: #{tpu_custom_call.1} parent=5 // pred_check_branch
        %380 = sbr.rel (%p378) target = $region40
      $region39: #{tpu_custom_call.1} parent=5 // pred_region
        // Predicated region
        $region41: #{tpu_custom_call.1} parent=39 // pred_check
          %p381 = pneg %p52
        $region42: #{tpu_custom_call.1} parent=39 // pred_check_branch
          %383 = sbr.rel (%p381) target = $region44
        $region43: #{tpu_custom_call.1} parent=39 // pred_region
          %s384 = sand.u32 %s42, 1
          %s385 = scalar_lea.sflag [#allocation3], %s384
          %s386 = sand.u32 %s42, 1
          %s387 = smul.addr %s386, 8
          %s388 = scalar_lea.vmem [#allocation2], %s387
          %s390 = ssub.s32 128, 128
          %391 = vsyncadd %s385, %s390
          %s392 = smul.addr %s32, 128
          %s393 = scalar_lea.hbm %s0, %s392
          %s395 = sshll.u32 %s388, 4
          %s396 = int_to_ptr.vmem [resolvable:$true] %s395
          %398 = dma.hbm_to_vmem [thread:$0]  %s393, 128, %s396, %s385
        $region44: #{tpu_custom_call.1} parent=39 // pred_fallthru
          _
        // Predicated region
        $region45: #{tpu_custom_call.1} parent=39 // pred_check
          %p399 = pneg %p78
        $region46: #{tpu_custom_call.1} parent=39 // pred_check_branch
          %401 = sbr.rel (%p399) target = $region48
        $region47: #{tpu_custom_call.1} parent=39 // pred_region
          %s402 = sand.u32 %s32, 1
          %s403 = scalar_lea.sflag [#allocation6], %s402
          %s404 = sand.u32 %s68, 1
          %s405 = smul.addr %s404, 8
          %s406 = scalar_lea.vmem [#allocation5], %s405
          %s408 = ssub.s32 128, 128
          %409 = vsyncadd %s403, %s408
          %s410 = smul.addr %s32, 128
          %s411 = scalar_lea.hbm %s1, %s410
          %s413 = sshll.u32 %s406, 4
          %s414 = int_to_ptr.vmem [resolvable:$true] %s413
          %416 = dma.hbm_to_vmem [thread:$0]  %s411, 128, %s414, %s403
        $region48: #{tpu_custom_call.1} parent=39 // pred_fallthru
          _
        // Predicated region
        $region49: #{tpu_custom_call.1} parent=39 // pred_check
          %p417 = pneg %p104
        $region50: #{tpu_custom_call.1} parent=39 // pred_check_branch
          %419 = sbr.rel (%p417) target = $region52
        $region51: #{tpu_custom_call.1} parent=39 // pred_region
          %s420 = sand.u32 %s32, 1
          %s421 = scalar_lea.sflag [#allocation6], %s420
          %s422 = sand.u32 %s94, 1
          %s423 = smul.addr %s422, 8
          %s424 = scalar_lea.vmem [#allocation7], %s423
          %s426 = ssub.s32 128, 128
          %427 = vsyncadd %s421, %s426
          %s428 = smul.addr %s32, 128
          %s429 = scalar_lea.hbm %s2, %s428
          %s431 = sshll.u32 %s424, 4
          %s432 = int_to_ptr.vmem [resolvable:$true] %s431
          %434 = dma.hbm_to_vmem [thread:$0]  %s429, 128, %s432, %s421
        $region52: #{tpu_custom_call.1} parent=39 // pred_fallthru
          _
      $region40: #{tpu_custom_call.1} parent=5 // pred_fallthru
        _
      %p435 = scmp.le.s32.totalorder 1, %s32
      %p436 = scmp.lt.s32.totalorder %s32, 3
      %p437 = pnand %p435, %p436
      %p438 = pneg %p437
      // Predicated region
      $region53: #{tpu_custom_call.1} parent=5 // pred_check
        _
      $region54: #{tpu_custom_call.1} parent=5 // pred_check_branch
        %440 = sbr.rel (%p437) target = $region56
      $region55: #{tpu_custom_call.1} parent=5 // pred_region
        %s441 = ssub.s32 %s32, 1
        %s442 = sand.u32 %s45, 1
        %s443 = scalar_lea.sflag [#allocation3], %s442
        %s444 = sand.u32 %s45, 1
        %s445 = smul.addr %s444, 8
        %s446 = scalar_lea.vmem [#allocation2], %s445
        // Predicated region
        $region57: #{tpu_custom_call.1} parent=55 // pred_check
          %p447 = pneg %p58
        $region58: #{tpu_custom_call.1} parent=55 // pred_check_branch
          %449 = sbr.rel (%p447) target = $region60
        $region59: #{tpu_custom_call.1} parent=55 // pred_region
          %450 = dma.done %s443, 128
        $region60: #{tpu_custom_call.1} parent=55 // pred_fallthru
          _
        %s451 = sand.u32 %s37, 1
        %s452 = scalar_lea.sflag [#allocation6], %s451
        %s453 = sand.u32 %s71, 1
        %s454 = smul.addr %s453, 8
        %s455 = scalar_lea.vmem [#allocation5], %s454
        // Predicated region
        $region61: #{tpu_custom_call.1} parent=55 // pred_check
          %p456 = pneg %p84
        $region62: #{tpu_custom_call.1} parent=55 // pred_check_branch
          %458 = sbr.rel (%p456) target = $region64
        $region63: #{tpu_custom_call.1} parent=55 // pred_region
          %459 = dma.done %s452, 128
        $region64: #{tpu_custom_call.1} parent=55 // pred_fallthru
          _
        %s460 = sand.u32 %s37, 1
        %s461 = scalar_lea.sflag [#allocation6], %s460
        %s462 = sand.u32 %s97, 1
        %s463 = smul.addr %s462, 8
        %s464 = scalar_lea.vmem [#allocation7], %s463
        // Predicated region
        $region65: #{tpu_custom_call.1} parent=55 // pred_check
          %p465 = pneg %p110
        $region66: #{tpu_custom_call.1} parent=55 // pred_check_branch
          %467 = sbr.rel (%p465) target = $region68
        $region67: #{tpu_custom_call.1} parent=55 // pred_region
          %468 = dma.done %s461, 128
        $region68: #{tpu_custom_call.1} parent=55 // pred_fallthru
          _
        // Predicated region
        $region69: #{tpu_custom_call.1} parent=55 // pred_check
          %p469 = pneg %p131
        $region70: #{tpu_custom_call.1} parent=55 // pred_check_branch
          %471 = sbr.rel (%p469) target = $region72
        $region71: #{tpu_custom_call.1} parent=55 // pred_region
          %472 = dma.done [#allocation9], 512
        $region72: #{tpu_custom_call.1} parent=55 // pred_fallthru
          _
        // Predicated region
        $region73: #{tpu_custom_call.1} parent=55 // pred_check
          %p473 = pneg %p152
        $region74: #{tpu_custom_call.1} parent=55 // pred_check_branch
          %475 = sbr.rel (%p473) target = $region76
        $region75: #{tpu_custom_call.1} parent=55 // pred_region
          %476 = dma.done [#allocation9], 512
        $region76: #{tpu_custom_call.1} parent=55 // pred_fallthru
          _
        // Predicated region
        $region77: #{tpu_custom_call.1} parent=55 // pred_check
          %p477 = pneg %p173
        $region78: #{tpu_custom_call.1} parent=55 // pred_check_branch
          %479 = sbr.rel (%p477) target = $region80
        $region79: #{tpu_custom_call.1} parent=55 // pred_region
          %480 = dma.done [#allocation12], 512
        $region80: #{tpu_custom_call.1} parent=55 // pred_fallthru
          _
        %s481 = sand.u32 %s45, 1
        %s482 = scalar_lea.sflag [#allocation3], %s481
        %s483 = sand.u32 %s45, 1
        %s484 = smul.addr %s483, 8
        %s485 = scalar_lea.vmem [#allocation2], %s484
        %p486 = pneg %p58
        %p487 = pneg %p55
        %s488 = sand.u32 %s37, 1
        %s489 = scalar_lea.sflag [#allocation6], %s488
        %s490 = sand.u32 %s71, 1
        %s491 = smul.addr %s490, 8
        %s492 = scalar_lea.vmem [#allocation5], %s491
        %p493 = pneg %p84
        %p494 = pneg %p81
        %s495 = sand.u32 %s37, 1
        %s496 = scalar_lea.sflag [#allocation6], %s495
        %s497 = sand.u32 %s97, 1
        %s498 = smul.addr %s497, 8
        %s499 = scalar_lea.vmem [#allocation7], %s498
        %p500 = pneg %p110
        %p501 = pneg %p107
        %p502 = pneg %p131
        %p503 = pneg %p128
        %p504 = pneg %p152
        %p505 = pneg %p149
        %p506 = pneg %p173
        %p507 = pneg %p170
        %p508 = pneg %p194
        %p509 = pneg %p191
        %p510 = pneg %p215
        %p511 = pneg %p212
        %p512 = pneg %p236
        %p513 = pneg %p233
        %p514 = pneg %p262
        %p515 = pneg %p259
        %s516 = sand.u32 %s249, 1
        %s517 = scalar_lea.sflag [#allocation4], %s516
        %s518 = sand.u32 %s249, 1
        %s519 = smul.addr %s518, 8
        %s520 = scalar_lea.vmem [#allocation13], %s519
        %p521 = pneg %p288
        %p522 = pneg %p285
        %s523 = sand.u32 %s37, 1
        %s524 = scalar_lea.sflag [#allocation15], %s523
        %s525 = sand.u32 %s275, 1
        %s526 = smul.addr %s525, 8
        %s527 = scalar_lea.vmem [#allocation14], %s526
        %p528 = pneg %p314
        %p529 = pneg %p311
        %s530 = sand.u32 %s37, 1
        %s531 = scalar_lea.sflag [#allocation15], %s530
        %s532 = sand.u32 %s301, 1
        %s533 = smul.addr %s532, 8
        %s534 = scalar_lea.vmem [#allocation16], %s533
        %v535 = vld [vmem:[%s446] sm:$0xff]
        %v536 = vld [vmem:[#allocation8] sm:$0xff]
        %v537 = vld [vmem:[#allocation8 + $0x8] sm:$0xff]
        %v538 = vld [vmem:[#allocation8 + $0x10] sm:$0xff]
        %v539 = vld [vmem:[#allocation8 + $0x18] sm:$0xff]
        %v540 = vld [vmem:[%s6] sm:$0x1]
        %v542 = vlaneseq
        %v543 = vshrl.u32 %v542, 7
        %v544 = vsub.s32 0, %v543
        %v545 = vrot.slane %v540, %v544
        %vm547 = vcmask 261120
        %v549 = vsel %vm547, %v535, 0
        %551 = vmatprep.subr.mxu0 0.0
        %552 = vmatpush1.msra.mxu0 0.0
        %553 = vmatprep.subr.mxu0 0.0
        %554 = vmatpush1.msra.mxu0 0.0
        %555 = vmatprep.subr.mxu0 0.0
        %556 = vmatpush1.msra.mxu0 0.0
        %557 = vmatprep.subr.mxu0 0.0
        %558 = vmatpush1.msra.mxu0 0.0
        %559 = vmatprep.subr.mxu0 0.0
        %560 = vmatpush1.msra.mxu0 0.0
        %561 = vmatprep.subr.mxu0 0.0
        %562 = vmatpush1.msra.mxu0 0.0
        %563 = vmatprep.subr.mxu0 0.0
        %564 = vmatpush1.msra.mxu0 0.0
        %565 = vmatprep.subr.mxu0 0.0
        %566 = vmatpush1.msra.mxu0 0.0
        %567 = vmatprep.subr.mxu0 0.0
        %568 = vmatpush1.msra.mxu0 0.0
        %569 = vmatprep.subr.mxu0 0.0
        %570 = vmatpush1.msra.mxu0 0.0
        %571 = vmatprep.subr.mxu0 0.0
        %572 = vmatpush1.msra.mxu0 0.0
        %573 = vmatprep.subr.mxu0 0.0
        %574 = vmatpush1.msra.mxu0 0.0
        %575 = vmatprep.subr.mxu0 0.0
        %576 = vmatpush1.msra.mxu0 %v539
        %577 = vmatprep.subr.mxu0 0.0
        %578 = vmatpush1.msra.mxu0 %v538
        %579 = vmatprep.subr.mxu0 0.0
        %580 = vmatpush1.msra.mxu0 %v537
        %581 = vmatprep.subr.mxu0 0.0
        %582 = vmatpush1.msra.mxu0 %v536
        %583 = vmatprep.subr.mxu0 0.0
        %584 = vmatpush2.msra.mxu0 0.0
        %585 = vmatprep.subr.mxu0 0.0
        %586 = vmatpush2.msra.mxu0 0.0
        %587 = vmatprep.subr.mxu0 0.0
        %588 = vmatpush2.msra.mxu0 0.0
        %589 = vmatprep.subr.mxu0 0.0
        %590 = vmatpush2.msra.mxu0 0.0
        %591 = vmatprep.subr.mxu0 0.0
        %592 = vmatpush2.msra.mxu0 0.0
        %593 = vmatprep.subr.mxu0 0.0
        %594 = vmatpush2.msra.mxu0 0.0
        %595 = vmatprep.subr.mxu0 0.0
        %596 = vmatpush2.msra.mxu0 0.0
        %597 = vmatprep.subr.mxu0 0.0
        %598 = vmatpush2.msra.mxu0 0.0
        %599 = vmatprep.subr.mxu0 0.0
        %600 = vmatpush2.msra.mxu0 0.0
        %601 = vmatprep.subr.mxu0 0.0
        %602 = vmatpush2.msra.mxu0 0.0
        %603 = vmatprep.subr.mxu0 0.0
        %604 = vmatpush2.msra.mxu0 0.0
        %605 = vmatprep.subr.mxu0 0.0
        %606 = vmatpush2.msra.mxu0 0.0
        %607 = vmatprep.subr.mxu0 0.0
        %608 = vmatpush2.msra.mxu0 0.0
        %609 = vmatprep.subr.mxu0 0.0
        %610 = vmatpush2.msra.mxu0 0.0
        %611 = vmatprep.subr.mxu0 0.0
        %612 = vmatpush2.msra.mxu0 0.0
        %613 = vmatprep.subr.mxu0 0.0
        %614 = vmatpush2.msra.mxu0 0.0
        %615 = vmatprep.mubr.f32.mxu0 0.0
        %616 = vmatmul.mubr.f32.gmra.mxu0 %v549
        %v617 = vpop.f32.mrf.mxu0
        %v618 = vadd.f32 %v545, %v617
        %v619 = vpop.f32.mrf.mxu0
        %620 = vdwg.mxu0
        %621 = vst.msk [vmem:[%s520] sm:$0xff] %vm547, %v618
        %v622 = vld [vmem:[%s455] sm:$0xff]
        %v623 = vld [vmem:[#allocation10] sm:$0xff]
        %v624 = vld [vmem:[#allocation10 + $0x8] sm:$0xff]
        %v625 = vld [vmem:[#allocation10 + $0x10] sm:$0xff]
        %v626 = vld [vmem:[#allocation10 + $0x18] sm:$0xff]
        %v627 = vld [vmem:[%s7] sm:$0x1]
        %v629 = vlaneseq
        %v630 = vshrl.u32 %v629, 7
        %v631 = vsub.s32 0, %v630
        %v632 = vrot.slane %v627, %v631
        %v635 = vsel %vm547, %v622, 0
        %637 = vmatprep.subr.mxu0 0.0
        %638 = vmatpush1.msra.mxu0 0.0
        %639 = vmatprep.subr.mxu0 0.0
        %640 = vmatpush1.msra.mxu0 0.0
        %641 = vmatprep.subr.mxu0 0.0
        %642 = vmatpush1.msra.mxu0 0.0
        %643 = vmatprep.subr.mxu0 0.0
        %644 = vmatpush1.msra.mxu0 0.0
        %645 = vmatprep.subr.mxu0 0.0
        %646 = vmatpush1.msra.mxu0 0.0
        %647 = vmatprep.subr.mxu0 0.0
        %648 = vmatpush1.msra.mxu0 0.0
        %649 = vmatprep.subr.mxu0 0.0
        %650 = vmatpush1.msra.mxu0 0.0
        %651 = vmatprep.subr.mxu0 0.0
        %652 = vmatpush1.msra.mxu0 0.0
        %653 = vmatprep.subr.mxu0 0.0
        %654 = vmatpush1.msra.mxu0 0.0
        %655 = vmatprep.subr.mxu0 0.0
        %656 = vmatpush1.msra.mxu0 0.0
        %657 = vmatprep.subr.mxu0 0.0
        %658 = vmatpush1.msra.mxu0 0.0
        %659 = vmatprep.subr.mxu0 0.0
        %660 = vmatpush1.msra.mxu0 0.0
        %661 = vmatprep.subr.mxu0 0.0
        %662 = vmatpush1.msra.mxu0 %v626
        %663 = vmatprep.subr.mxu0 0.0
        %664 = vmatpush1.msra.mxu0 %v625
        %665 = vmatprep.subr.mxu0 0.0
        %666 = vmatpush1.msra.mxu0 %v624
        %667 = vmatprep.subr.mxu0 0.0
        %668 = vmatpush1.msra.mxu0 %v623
        %669 = vmatprep.subr.mxu0 0.0
        %670 = vmatpush2.msra.mxu0 0.0
        %671 = vmatprep.subr.mxu0 0.0
        %672 = vmatpush2.msra.mxu0 0.0
        %673 = vmatprep.subr.mxu0 0.0
        %674 = vmatpush2.msra.mxu0 0.0
        %675 = vmatprep.subr.mxu0 0.0
        %676 = vmatpush2.msra.mxu0 0.0
        %677 = vmatprep.subr.mxu0 0.0
        %678 = vmatpush2.msra.mxu0 0.0
        %679 = vmatprep.subr.mxu0 0.0
        %680 = vmatpush2.msra.mxu0 0.0
        %681 = vmatprep.subr.mxu0 0.0
        %682 = vmatpush2.msra.mxu0 0.0
        %683 = vmatprep.subr.mxu0 0.0
        %684 = vmatpush2.msra.mxu0 0.0
        %685 = vmatprep.subr.mxu0 0.0
        %686 = vmatpush2.msra.mxu0 0.0
        %687 = vmatprep.subr.mxu0 0.0
        %688 = vmatpush2.msra.mxu0 0.0
        %689 = vmatprep.subr.mxu0 0.0
        %690 = vmatpush2.msra.mxu0 0.0
        %691 = vmatprep.subr.mxu0 0.0
        %692 = vmatpush2.msra.mxu0 0.0
        %693 = vmatprep.subr.mxu0 0.0
        %694 = vmatpush2.msra.mxu0 0.0
        %695 = vmatprep.subr.mxu0 0.0
        %696 = vmatpush2.msra.mxu0 0.0
        %697 = vmatprep.subr.mxu0 0.0
        %698 = vmatpush2.msra.mxu0 0.0
        %699 = vmatprep.subr.mxu0 0.0
        %700 = vmatpush2.msra.mxu0 0.0
        %701 = vmatprep.mubr.f32.mxu0 0.0
        %702 = vmatmul.mubr.f32.gmra.mxu0 %v635
        %v703 = vpop.f32.mrf.mxu0
        %v704 = vadd.f32 %v632, %v703
        %v705 = vpop.f32.mrf.mxu0
        %706 = vdwg.mxu0
        %707 = vst.msk [vmem:[%s527] sm:$0xff] %vm547, %v704
        %v708 = vld [vmem:[%s464] sm:$0xff]
        %v709 = vld [vmem:[#allocation11] sm:$0xff]
        %v710 = vld [vmem:[#allocation11 + $0x8] sm:$0xff]
        %v711 = vld [vmem:[#allocation11 + $0x10] sm:$0xff]
        %v712 = vld [vmem:[#allocation11 + $0x18] sm:$0xff]
        %v713 = vld [vmem:[%s8] sm:$0x1]
        %v715 = vlaneseq
        %v716 = vshrl.u32 %v715, 7
        %v717 = vsub.s32 0, %v716
        %v718 = vrot.slane %v713, %v717
        %v721 = vsel %vm547, %v708, 0
        %723 = vmatprep.subr.mxu0 0.0
        %724 = vmatpush1.msra.mxu0 0.0
        %725 = vmatprep.subr.mxu0 0.0
        %726 = vmatpush1.msra.mxu0 0.0
        %727 = vmatprep.subr.mxu0 0.0
        %728 = vmatpush1.msra.mxu0 0.0
        %729 = vmatprep.subr.mxu0 0.0
        %730 = vmatpush1.msra.mxu0 0.0
        %731 = vmatprep.subr.mxu0 0.0
        %732 = vmatpush1.msra.mxu0 0.0
        %733 = vmatprep.subr.mxu0 0.0
        %734 = vmatpush1.msra.mxu0 0.0
        %735 = vmatprep.subr.mxu0 0.0
        %736 = vmatpush1.msra.mxu0 0.0
        %737 = vmatprep.subr.mxu0 0.0
        %738 = vmatpush1.msra.mxu0 0.0
        %739 = vmatprep.subr.mxu0 0.0
        %740 = vmatpush1.msra.mxu0 0.0
        %741 = vmatprep.subr.mxu0 0.0
        %742 = vmatpush1.msra.mxu0 0.0
        %743 = vmatprep.subr.mxu0 0.0
        %744 = vmatpush1.msra.mxu0 0.0
        %745 = vmatprep.subr.mxu0 0.0
        %746 = vmatpush1.msra.mxu0 0.0
        %747 = vmatprep.subr.mxu0 0.0
        %748 = vmatpush1.msra.mxu0 %v712
        %749 = vmatprep.subr.mxu0 0.0
        %750 = vmatpush1.msra.mxu0 %v711
        %751 = vmatprep.subr.mxu0 0.0
        %752 = vmatpush1.msra.mxu0 %v710
        %753 = vmatprep.subr.mxu0 0.0
        %754 = vmatpush1.msra.mxu0 %v709
        %755 = vmatprep.subr.mxu0 0.0
        %756 = vmatpush2.msra.mxu0 0.0
        %757 = vmatprep.subr.mxu0 0.0
        %758 = vmatpush2.msra.mxu0 0.0
        %759 = vmatprep.subr.mxu0 0.0
        %760 = vmatpush2.msra.mxu0 0.0
        %761 = vmatprep.subr.mxu0 0.0
        %762 = vmatpush2.msra.mxu0 0.0
        %763 = vmatprep.subr.mxu0 0.0
        %764 = vmatpush2.msra.mxu0 0.0
        %765 = vmatprep.subr.mxu0 0.0
        %766 = vmatpush2.msra.mxu0 0.0
        %767 = vmatprep.subr.mxu0 0.0
        %768 = vmatpush2.msra.mxu0 0.0
        %769 = vmatprep.subr.mxu0 0.0
        %770 = vmatpush2.msra.mxu0 0.0
        %771 = vmatprep.subr.mxu0 0.0
        %772 = vmatpush2.msra.mxu0 0.0
        %773 = vmatprep.subr.mxu0 0.0
        %774 = vmatpush2.msra.mxu0 0.0
        %775 = vmatprep.subr.mxu0 0.0
        %776 = vmatpush2.msra.mxu0 0.0
        %777 = vmatprep.subr.mxu0 0.0
        %778 = vmatpush2.msra.mxu0 0.0
        %779 = vmatprep.subr.mxu0 0.0
        %780 = vmatpush2.msra.mxu0 0.0
        %781 = vmatprep.subr.mxu0 0.0
        %782 = vmatpush2.msra.mxu0 0.0
        %783 = vmatprep.subr.mxu0 0.0
        %784 = vmatpush2.msra.mxu0 0.0
        %785 = vmatprep.subr.mxu0 0.0
        %786 = vmatpush2.msra.mxu0 0.0
        %787 = vmatprep.mubr.f32.mxu0 0.0
        %788 = vmatmul.mubr.f32.gmra.mxu0 %v721
        %v789 = vpop.f32.mrf.mxu0
        %v790 = vadd.f32 %v718, %v789
        %v791 = vpop.f32.mrf.mxu0
        %792 = vdwg.mxu0
        %793 = vst.msk [vmem:[%s534] sm:$0xff] %vm547, %v790
        %s794 = sand.u32 %s249, 1
        %s795 = scalar_lea.sflag [#allocation4], %s794
        %s796 = sand.u32 %s249, 1
        %s797 = smul.addr %s796, 8
        %s798 = scalar_lea.vmem [#allocation13], %s797
        %s799 = sand.u32 %s37, 1
        %s800 = scalar_lea.sflag [#allocation15], %s799
        %s801 = sand.u32 %s275, 1
        %s802 = smul.addr %s801, 8
        %s803 = scalar_lea.vmem [#allocation14], %s802
        %s804 = sand.u32 %s37, 1
        %s805 = scalar_lea.sflag [#allocation15], %s804
        %s806 = sand.u32 %s301, 1
        %s807 = smul.addr %s806, 8
        %s808 = scalar_lea.vmem [#allocation16], %s807
        // Predicated region
        $region81: #{tpu_custom_call.1} parent=55 // pred_check
          %p809 = pneg %p259
        $region82: #{tpu_custom_call.1} parent=55 // pred_check_branch
          %811 = sbr.rel (%p809) target = $region84
        $region83: #{tpu_custom_call.1} parent=55 // pred_region
          %s813 = ssub.s32 128, 128
          %814 = vsyncadd %s795, %s813
          %s815 = smul.addr %s37, 128
          %s816 = scalar_lea.hbm %s9, %s815
          %s818 = sshll.u32 %s798, 4
          %s819 = int_to_ptr.vmem [resolvable:$true] %s818
          %821 = dma.vmem_to_hbm [thread:$0]  %s819, 128, %s816, %s795
        $region84: #{tpu_custom_call.1} parent=55 // pred_fallthru
          _
        // Predicated region
        $region85: #{tpu_custom_call.1} parent=55 // pred_check
          %p822 = pneg %p285
        $region86: #{tpu_custom_call.1} parent=55 // pred_check_branch
          %824 = sbr.rel (%p822) target = $region88
        $region87: #{tpu_custom_call.1} parent=55 // pred_region
          %s826 = ssub.s32 128, 128
          %827 = vsyncadd %s800, %s826
          %s828 = smul.addr %s37, 128
          %s829 = scalar_lea.hbm %s10, %s828
          %s831 = sshll.u32 %s803, 4
          %s832 = int_to_ptr.vmem [resolvable:$true] %s831
          %834 = dma.vmem_to_hbm [thread:$0]  %s832, 128, %s829, %s800
        $region88: #{tpu_custom_call.1} parent=55 // pred_fallthru
          _
        // Predicated region
        $region89: #{tpu_custom_call.1} parent=55 // pred_check
          %p835 = pneg %p311
        $region90: #{tpu_custom_call.1} parent=55 // pred_check_branch
          %837 = sbr.rel (%p835) target = $region92
        $region91: #{tpu_custom_call.1} parent=55 // pred_region
          %s839 = ssub.s32 128, 128
          %840 = vsyncadd %s805, %s839
          %s841 = smul.addr %s37, 128
          %s842 = scalar_lea.hbm %s11, %s841
          %s844 = sshll.u32 %s808, 4
          %s845 = int_to_ptr.vmem [resolvable:$true] %s844
          %847 = dma.vmem_to_hbm [thread:$0]  %s845, 128, %s842, %s805
        $region92: #{tpu_custom_call.1} parent=55 // pred_fallthru
          _
      $region56: #{tpu_custom_call.1} parent=5 // pred_fallthru
        _
      %p848 = scmp.le.s32.totalorder 2, %s32
      // Predicated region
      $region93: #{tpu_custom_call.1} parent=5 // pred_check
        %p849 = pneg %p848
      $region94: #{tpu_custom_call.1} parent=5 // pred_check_branch
        %851 = sbr.rel (%p849) target = $region96
      $region95: #{tpu_custom_call.1} parent=5 // pred_region
        %s852 = ssub.s32 %s32, 2
        // Predicated region
        $region97: #{tpu_custom_call.1} parent=95 // pred_check
          %p853 = pneg %p265
        $region98: #{tpu_custom_call.1} parent=95 // pred_check_branch
          %855 = sbr.rel (%p853) target = $region100
        $region99: #{tpu_custom_call.1} parent=95 // pred_region
          %s856 = sand.u32 %s250, 1
          %s857 = scalar_lea.sflag [#allocation4], %s856
          %s858 = sand.u32 %s250, 1
          %s859 = smul.addr %s858, 8
          %s860 = scalar_lea.vmem [#allocation13], %s859
          %861 = dma.done %s857, 128
        $region100: #{tpu_custom_call.1} parent=95 // pred_fallthru
          _
        // Predicated region
        $region101: #{tpu_custom_call.1} parent=95 // pred_check
          %p862 = pneg %p291
        $region102: #{tpu_custom_call.1} parent=95 // pred_check_branch
          %864 = sbr.rel (%p862) target = $region104
        $region103: #{tpu_custom_call.1} parent=95 // pred_region
          %s865 = sand.u32 %s38, 1
          %s866 = scalar_lea.sflag [#allocation15], %s865
          %s867 = sand.u32 %s276, 1
          %s868 = smul.addr %s867, 8
          %s869 = scalar_lea.vmem [#allocation14], %s868
          %870 = dma.done %s866, 128
        $region104: #{tpu_custom_call.1} parent=95 // pred_fallthru
          _
        // Predicated region
        $region105: #{tpu_custom_call.1} parent=95 // pred_check
          %p871 = pneg %p317
        $region106: #{tpu_custom_call.1} parent=95 // pred_check_branch
          %873 = sbr.rel (%p871) target = $region108
        $region107: #{tpu_custom_call.1} parent=95 // pred_region
          %s874 = sand.u32 %s38, 1
          %s875 = scalar_lea.sflag [#allocation15], %s874
          %s876 = sand.u32 %s302, 1
          %s877 = smul.addr %s876, 8
          %s878 = scalar_lea.vmem [#allocation16], %s877
          %879 = dma.done %s875, 128
        $region108: #{tpu_custom_call.1} parent=95 // pred_fallthru
          _
      $region96: #{tpu_custom_call.1} parent=5 // pred_fallthru
        _
    $region6: #{tpu_custom_call.1} parent=1 // loop_footer
      %s36 = sadd.s32 1, %s32
    $region7: #{tpu_custom_call.1} parent=1 // loop_footer_branch
      %31 = sbr.rel target = $region3
    $region8: #{tpu_custom_call.1} parent=1 // loop_exit
      _
    %880 = vsyncpa [#allocation3], 1
    %s881 = scalar_lea.sflag [#allocation3], 1
    %882 = vsyncpa %s881, 1
    %883 = vsyncpa [#allocation6], 1
    %s884 = scalar_lea.sflag [#allocation6], 1
    %885 = vsyncpa %s884, 1
    %886 = vsyncpa [#allocation9], 1
    %887 = vsyncpa [#allocation12], 1
    %888 = vsyncpa [#allocation4], 1
    %s889 = scalar_lea.sflag [#allocation4], 1
    %890 = vsyncpa %s889, 1
    %891 = vsyncpa [#allocation15], 1
    %s892 = scalar_lea.sflag [#allocation15], 1
    %893 = vsyncpa %s892, 1

</llo_original>
